<compile_context>
chip_gen: v5e
topology: v5e:2x2
jax: 0.10.0
libtpu: 0.0.40
codegen_flags: <defaults>
</compile_context>

<pallas_src>
import jax
import jax.numpy as jnp
from jax import lax
from jax.experimental import pallas as pl
from jax.experimental.pallas import tpu as pltpu

# ----------------------- small demo configuration -----------------------
B = 2          # batch
C_IN = 4       # in_channel
C_OUT = 8      # out_channel
KH, KW = 3, 3  # kernel
FREQ = 16      # freq_len  == H
TIME = 16      # time_len  == W
STRIDE = 1     # module default
PADDING = 0    # module default


def _round_up(v, m):
  return (v + m - 1) // m * m


# ----------------------- deterministic parameter init -----------------------
def _kaiming(key, shape, fan_out):
  # kaiming_normal_(mode='fan_out', nonlinearity='relu') -> std = sqrt(2/fan_out)
  return jax.random.normal(key, shape, jnp.float32) * jnp.sqrt(2.0 / fan_out)


def init_params(key):
  ks = jax.random.split(key, 5)
  return dict(
      # ChannelFreqGate: Conv1d(freq, freq, 3) ; Conv1d(freq, KH, 3)
      w1f=_kaiming(ks[0], (FREQ, FREQ, 3), FREQ * 3), b1f=jnp.zeros((FREQ,), jnp.float32),
      w2f=_kaiming(ks[1], (KH, FREQ, 3), KH * 3),     b2f=jnp.zeros((KH,), jnp.float32),
      # ChannelTimeGate: Conv1d(time, time, 3) ; Conv1d(time, KW, 3)
      w1t=_kaiming(ks[2], (TIME, TIME, 3), TIME * 3), b1t=jnp.zeros((TIME,), jnp.float32),
      w2t=_kaiming(ks[3], (KW, TIME, 3), KW * 3),     b2t=jnp.zeros((KW,), jnp.float32),
      # static conv weight (O, C, KH, KW); bias=False (module default)
      weight=_kaiming(ks[4], (C_OUT, C_IN, KH, KW), C_OUT * KH * KW),
  )


# ----------------------- tiny gate preprocessing (plain JAX glue) -----------------------
def _conv1d_same(x, w, b):
  # x: (B, Cin, L); w: (Cout, Cin, 3); cross-correlation, padding=1 (PyTorch Conv1d)
  L = x.shape[-1]
  xp = jnp.pad(x, ((0, 0), (0, 0), (1, 1)))
  y = sum(jnp.einsum('oi,bil->bol', w[:, :, k], xp[:, :, k:k + L]) for k in range(w.shape[-1]))
  return y + b[None, :, None]


def compute_gates(x, p):
  # x: (B, C, H, W)
  xf = jnp.transpose(jnp.mean(x, axis=3), (0, 2, 1))        # (B, H, C)
  hf = jax.nn.relu(_conv1d_same(xf, p['w1f'], p['b1f']))
  gf = _conv1d_same(hf, p['w2f'], p['b2f'])                 # (B, KH, C)

  xt = jnp.transpose(jnp.mean(x, axis=2), (0, 2, 1))        # (B, W, C)
  ht = jax.nn.relu(_conv1d_same(xt, p['w1t'], p['b1t']))
  gt = _conv1d_same(ht, p['w2t'], p['b2t'])                 # (B, KW, C)
  return gf, gt


# ----------------------- Pallas kernel -----------------------
def acnn2d_kernel(p_ref, g_ref, w_ref, o_ref):
  # p_ref: (1, K_pad, N_pad)  im2col patches for this sample (K = KH*KW*C, N = H_out*W_out)
  # g_ref: (1, 1, K_pad)      pre-summed freq+time gate logits, same (i,j,c) flattening
  # w_ref: (O, K_pad)         static conv weight, flattened (i,j,c)-major; padded rows are 0
  # o_ref: (1, O, N_pad)      lane-dense output slab
  gate = jax.nn.sigmoid(g_ref[0])                 # (1, K_pad): one vectorized EUP op
  wmod = w_ref[...] * gate                        # (O, K_pad): broadcast multiply over sublanes
  o_ref[0] = jnp.dot(wmod, p_ref[0],
                     preferred_element_type=jnp.float32).astype(o_ref.dtype)


# ----------------------- wrapper -----------------------
def acnn2d_forward(x, params, *, stride=STRIDE, padding=PADDING):
  # x: (B, C, H, W) float32, NCHW like the PyTorch module.
  assert stride == 1  # TODO(synk): stride > 1 / dilation > 1 paths not implemented in the Pallas kernel.
  gf, gt = compute_gates(x, params)                         # (B,KH,C), (B,KW,C)

  if padding:
    x = jnp.pad(x, ((0, 0), (0, 0), (padding, padding), (padding, padding)))
  b, c, h, w = x.shape
  h_out = h - KH + 1
  w_out = w - KW + 1
  n = h_out * w_out                                         # 196
  k = KH * KW * c                                           # 36
  n_pad = _round_up(n, 128)                                 # 256: lane-dense matmul N / output
  k_pad = _round_up(k, 8)                                   # 40:  sublane-aligned contraction

  # Pre-summed gate logits, flattened (i, j, ch)-major: (B, 1, K_pad).
  gate_logits = (gf[:, :, None, :] + gt[:, None, :, :]).reshape(b, 1, k)
  gate_logits = jnp.pad(gate_logits, ((0, 0), (0, 0), (0, k_pad - k)))

  # Static weight flattened the same way: (O, K_pad). Padded rows are zero, so
  # the padded contraction entries contribute nothing regardless of gate/patch pad.
  w_flat = jnp.transpose(params['weight'], (0, 2, 3, 1)).reshape(C_OUT, k)
  w_flat = jnp.pad(w_flat, ((0, 0), (0, k_pad - k)))

  # im2col patches: P[b, i*KW*C + j*C + ch, y*W_out + x] = x[b, ch, y+i, x+j]
  taps = []
  for i in range(KH):
    for j in range(KW):
      taps.append(x[:, :, i:i + h_out, j:j + w_out])        # (B, C, h_out, w_out)
  patches = jnp.stack(taps, axis=1).reshape(b, k, n)        # (B, K, N)
  patches = jnp.pad(patches, ((0, 0), (0, k_pad - k), (0, n_pad - n)))

  flops = 2 * b * C_OUT * k_pad * n_pad
  bytes_accessed = 4 * (patches.size + gate_logits.size + w_flat.size + b * C_OUT * n_pad)

  out_flat = pl.pallas_call(
      acnn2d_kernel,
      out_shape=jax.ShapeDtypeStruct((b, C_OUT, n_pad), jnp.float32),
      grid_spec=pltpu.PrefetchScalarGridSpec(
          num_scalar_prefetch=0,
          grid=(b,),
          in_specs=[
              pl.BlockSpec((1, k_pad, n_pad), lambda i: (i, 0, 0)),   # patches (per sample)
              pl.BlockSpec((1, 1, k_pad), lambda i: (i, 0, 0)),       # gate logits (per sample)
              pl.BlockSpec((C_OUT, k_pad), lambda i: (0, 0)),         # static weight (shared)
          ],
          out_specs=pl.BlockSpec((1, C_OUT, n_pad), lambda i: (i, 0, 0)),
      ),
      compiler_params=pltpu.CompilerParams(dimension_semantics=("parallel",)),
      cost_estimate=pl.CostEstimate(flops=flops, transcendentals=b * k_pad,
                                    bytes_accessed=bytes_accessed),
  )(patches, gate_logits, w_flat)

  # Slice off lane padding and reshape straight back to NCHW (B, O, H_out, W_out).
  return out_flat[:, :, :n].reshape(b, C_OUT, h_out, w_out)


# ----------------------- pure-JAX reference (for sanity check) -----------------------
def acnn2d_reference(x, params):
  gf, gt = compute_gates(x, params)
  sig = jax.nn.sigmoid(jnp.transpose(gf, (0, 2, 1))[:, :, :, None] +
                       jnp.transpose(gt, (0, 2, 1))[:, :, None, :])  # (B, C, KH, KW)
  wmod = params['weight'][None] * sig[:, None]                       # (B, O, C, KH, KW)
  outs = []
  for i in range(x.shape[0]):
    o = lax.conv_general_dilated(x[i:i + 1], wmod[i], window_strides=(1, 1),
                                 padding='VALID',
                                 dimension_numbers=('NCHW', 'OIHW', 'NCHW'))
    outs.append(o[0])
  return jnp.stack(outs)


if __name__ == "__main__":
  key = jax.random.PRNGKey(0)
  k_param, k_x = jax.random.split(key)
  params = init_params(k_param)
  x = jax.random.normal(k_x, (B, C_IN, FREQ, TIME), jnp.float32)

  out = acnn2d_forward(x, params)
  out = jax.block_until_ready(out)

  ref = acnn2d_reference(x, params)
  assert out.shape == (B, C_OUT, FREQ - KH + 1, TIME - KW + 1), out.shape
  max_err = float(jnp.max(jnp.abs(out - ref)))
  if max_err > 5e-3:
    raise AssertionError(f"mismatch vs reference, max abs err = {max_err}")
  print("KERNEL_OK")
</pallas_src>

<mosaic_0001>
module attributes {stable_mosaic.version = 11 : i64} {
  func.func @acnn2d_kernel(%arg0: i32, %arg1: memref<1x40x256xf32, #tpu.memory_space<vmem>>, %arg2: memref<1x1x40xf32, #tpu.memory_space<vmem>>, %arg3: memref<8x40xf32, #tpu.memory_space<vmem>>, %arg4: memref<1x8x256xf32, #tpu.memory_space<vmem>>) attributes {dimension_semantics = [#tpu.dimension_semantics<parallel>], iteration_bounds = array<i64: 2>, scalar_prefetch = 0 : i64, scratch_operands = 0 : i64, tpu.core_type = #tpu.core_type<tc>, window_params = [{transform_indices = @transform_0, window_bounds = array<i64: 1, 40, 256>}, {transform_indices = @transform_1, window_bounds = array<i64: 1, 1, 40>}, {pipeline_mode = #tpu.pipeline_mode<synchronous>, transform_indices = @transform_2, window_bounds = array<i64: 8, 40>}, {transform_indices = @transform_3, window_bounds = array<i64: 1, 8, 256>}]} {
    %c0 = arith.constant 0 : index
    %c0_0 = arith.constant 0 : index
    %c0_1 = arith.constant 0 : index
    %0 = vector.load %arg2[%c0, %c0_0, %c0_1] : memref<1x1x40xf32, #tpu.memory_space<vmem>>, vector<1x1x40xf32>
    %1 = vector.shape_cast %0 : vector<1x1x40xf32> to vector<1x40xf32>
    %2 = arith.negf %1 : vector<1x40xf32>
    %3 = math.exp %2 : vector<1x40xf32>
    %cst = arith.constant 1.000000e+00 : f32
    %4 = vector.broadcast %cst : f32 to vector<1x40xf32>
    %5 = arith.addf %4, %3 : vector<1x40xf32>
    %6 = arith.divf %4, %5 : vector<1x40xf32>
    %c0_2 = arith.constant 0 : index
    %c0_3 = arith.constant 0 : index
    %7 = vector.load %arg3[%c0_2, %c0_3] : memref<8x40xf32, #tpu.memory_space<vmem>>, vector<8x40xf32>
    %8 = vector.broadcast %6 : vector<1x40xf32> to vector<8x40xf32>
    %9 = arith.mulf %7, %8 : vector<8x40xf32>
    %c0_4 = arith.constant 0 : index
    %c0_5 = arith.constant 0 : index
    %c0_6 = arith.constant 0 : index
    %10 = vector.load %arg1[%c0_4, %c0_5, %c0_6] : memref<1x40x256xf32, #tpu.memory_space<vmem>>, vector<1x40x256xf32>
    %11 = vector.shape_cast %10 : vector<1x40x256xf32> to vector<40x256xf32>
    %cst_7 = arith.constant dense<0.000000e+00> : vector<8x256xf32>
    %12 = tpu.matmul %9, %11, %cst_7 {dimension_numbers = #tpu.dot_dimension_numbers<[1], [0], [0], [1], [0, 0, 1, 1], [], []>} : vector<8x40xf32>, vector<40x256xf32>, vector<8x256xf32> -> vector<8x256xf32>
    %c0_8 = arith.constant 0 : index
    %c0_9 = arith.constant 0 : index
    %c0_10 = arith.constant 0 : index
    %13 = vector.load %arg4[%c0_8, %c0_9, %c0_10] : memref<1x8x256xf32, #tpu.memory_space<vmem>>, vector<1x8x256xf32>
    %14 = vector.shape_cast %13 : vector<1x8x256xf32> to vector<8x256xf32>
    %15 = vector.shape_cast %12 : vector<8x256xf32> to vector<1x8x256xf32>
    tpu.vector_store %arg4[%c0_8, %c0_9, %c0_10], %15 {strides = array<i32>} : memref<1x8x256xf32, #tpu.memory_space<vmem>>, vector<1x8x256xf32>,
    return
  }
  func.func @transform_0(%arg0: i32) -> (i32, i32, i32) {
    %c0_i32 = arith.constant 0 : i32
    %c0_i32_0 = arith.constant 0 : i32
    %c0_i32_1 = arith.constant 0 : i32
    return %arg0, %c0_i32, %c0_i32_0 : i32, i32, i32
  }
  func.func @transform_1(%arg0: i32) -> (i32, i32, i32) {
    %c0_i32 = arith.constant 0 : i32
    %c0_i32_0 = arith.constant 0 : i32
    %c0_i32_1 = arith.constant 0 : i32
    return %arg0, %c0_i32, %c0_i32_0 : i32, i32, i32
  }
  func.func @transform_2(%arg0: i32) -> (i32, i32) {
    %c0_i32 = arith.constant 0 : i32
    %c0_i32_0 = arith.constant 0 : i32
    %c0_i32_1 = arith.constant 0 : i32
    return %c0_i32, %c0_i32_0 : i32, i32
  }
  func.func @transform_3(%arg0: i32) -> (i32, i32, i32) {
    %c0_i32 = arith.constant 0 : i32
    %c0_i32_0 = arith.constant 0 : i32
    %c0_i32_1 = arith.constant 0 : i32
    return %arg0, %c0_i32, %c0_i32_0 : i32, i32, i32
  }
}

</mosaic_0001>

<llo_original>
// kernel: tpu_custom_call.1
$region0: #{tpu_custom_call.1}
  #allocation0 [shape = 'u32[]', space=smem, size = 0x4, offset = 0x4, fixed_abs, tag = 'smem constant byte address 0x4 - core index']
  #allocation1 [shape = 'u32[72,128]{1,0:T(1,128)}', space=vmem, size = 0x9000, scoped, tag = 'internal scratch']
  %s0 = inlined_call_operand.hbm [shape: f32[2,40,256], index: 0, kind: input, shape index: {}]
  %s1 = inlined_call_operand.hbm [shape: f32[2,1,40], index: 1, kind: input, shape index: {}]
  %s2 = inlined_call_operand.hbm [shape: f32[8,40], index: 2, kind: input, shape index: {}]
  %s3 = inlined_call_operand.hbm [shape: f32[2,8,256], index: 3, kind: output, shape index: {}]
  %s4 = sld [smem:[#allocation0]]
  $region57: #{tpu_custom_call.1} parent=0
    _
  %s6 = ssub.s32 1, %s4
  %s7 = scalar_select 0, %s6, %s4
  $region1: #{tpu_custom_call.1} parent=0
    #allocation2 [shape = 'u8[81920]{0}', space=vmem, size = 0x14000, scoped, tag = 'input window, operand 0']
    #allocation3 [shape = 's32[2]{0}', space=sflag, size = 0x8, scoped, tag = 'scoped memory for tpu_custom_call.1']
    #allocation4 [shape = 's32[2]{0}', space=sflag, size = 0x8, scoped, tag = 'scoped memory for tpu_custom_call.1']
    #allocation5 [shape = 'u8[1024]{0}', space=vmem, size = 0x400, scoped, tag = 'input window, operand 1']
    #allocation6 [shape = 's32[2]{0}', space=sflag, size = 0x8, scoped, tag = 'scoped memory for tpu_custom_call.1']
    #allocation7 [shape = 'u8[4096]{0}', space=vmem, size = 0x1000, scoped, tag = 'input window, operand 2, single buffered']
    #allocation8 [shape = 'u8[16384]{0}', space=vmem, size = 0x4000, scoped, tag = 'output window, operand 0']
    %8 = vsyncpa [#allocation3], 0
    %s9 = scalar_lea.sflag [#allocation3], 1
    %10 = vsyncpa %s9, 0
    %11 = vsyncpa [#allocation6], 0
    %s12 = scalar_lea.sflag [#allocation6], 1
    %13 = vsyncpa %s12, 0
    %14 = vsyncpa [#allocation4], 0
    %s15 = scalar_lea.sflag [#allocation4], 1
    %16 = vsyncpa %s15, 0
    loop: start=0, step=1, limit=4
    $region2: #{tpu_custom_call.1} parent=1 // loop_pre_header
      _
    $region3: #{tpu_custom_call.1} parent=1 // loop_header
      %s18 = sphi 0, %s22
      %p19 = scmp.ge.s32.totalorder %s18, 4
      %s28 = sphi 0, %s30
      %s31 = sphi 0, %s28
      %s32 = sphi 0, %s31
      %s48 = sphi 0, %s32
      %s54 = sphi 0, %s56
      %s57 = sphi 0, %s54
      %s58 = sphi 0, %s57
      %s74 = sphi 0, %s58
      %s78 = sphi 0, %s78
      %s80 = sphi 0, %s78
      %s81 = sphi 0, %s80
      %s95 = sphi 0, %s81
      %s101 = sphi 0, %s103
      %s104 = sphi 0, %s101
      %s105 = sphi 0, %s104
      %s121 = sphi 0, %s105
    $region4: #{tpu_custom_call.1} parent=1 // loop_header_branch
      %21 = sbr.rel (%p19) target = $region8
    $region5: #{tpu_custom_call.1} parent=1 // loop_body
      %s23 = ssub.s32 %s18, 1
      %s24 = ssub.s32 %s18, 2
      %s25 = sadd.s32 %s18, 1
      %s26 = ssub.s32 %s18, %s25
      %p27 = scmp.eq.s32.totalorder %s26, 0
      %s29 = sadd.s32 %s28, 1
      %s30 = scalar_select %p27, %s28, %s29
      %p33 = pneg %p27
      %p34 = scmp.eq.s32.totalorder %s18, 1
      %p35 = por %p33, %p34
      %p36 = scmp.ne.s32.totalorder %s28, %s31
      %p37 = scmp.eq.s32.totalorder %s18, 0
      %p38 = por %p36, %p37
      %p39 = scmp.ne.s32.totalorder %s28, %s31
      %p40 = scmp.eq.s32.totalorder %s23, 1
      %p41 = por %p39, %p40
      %p42 = scmp.ne.s32.totalorder %s31, %s32
      %p43 = scmp.eq.s32.totalorder %s23, 0
      %p44 = por %p42, %p43
      %p45 = scmp.ne.s32.totalorder %s31, %s32
      %p46 = scmp.eq.s32.totalorder %s24, 1
      %p47 = por %p45, %p46
      %p49 = scmp.ne.s32.totalorder %s32, %s48
      %p50 = scmp.eq.s32.totalorder %s24, 0
      %p51 = por %p49, %p50
      %s52 = ssub.s32 %s18, %s25
      %p53 = scmp.eq.s32.totalorder %s52, 0
      %s55 = sadd.s32 %s54, 1
      %s56 = scalar_select %p53, %s54, %s55
      %p59 = pneg %p53
      %p60 = scmp.eq.s32.totalorder %s18, 1
      %p61 = por %p59, %p60
      %p62 = scmp.ne.s32.totalorder %s54, %s57
      %p63 = scmp.eq.s32.totalorder %s18, 0
      %p64 = por %p62, %p63
      %p65 = scmp.ne.s32.totalorder %s54, %s57
      %p66 = scmp.eq.s32.totalorder %s23, 1
      %p67 = por %p65, %p66
      %p68 = scmp.ne.s32.totalorder %s57, %s58
      %p69 = scmp.eq.s32.totalorder %s23, 0
      %p70 = por %p68, %p69
      %p71 = scmp.ne.s32.totalorder %s57, %s58
      %p72 = scmp.eq.s32.totalorder %s24, 1
      %p73 = por %p71, %p72
      %p75 = scmp.ne.s32.totalorder %s58, %s74
      %p76 = scmp.eq.s32.totalorder %s24, 0
      %p77 = por %p75, %p76
      %s79 = sadd.s32 %s78, 1
      %p82 = scmp.eq.s32.totalorder %s18, 1
      %p83 = scmp.ne.s32.totalorder %s78, %s80
      %p84 = scmp.eq.s32.totalorder %s18, 0
      %p85 = por %p83, %p84
      %p86 = scmp.ne.s32.totalorder %s78, %s80
      %p87 = scmp.eq.s32.totalorder %s23, 1
      %p88 = por %p86, %p87
      %p89 = scmp.ne.s32.totalorder %s80, %s81
      %p90 = scmp.eq.s32.totalorder %s23, 0
      %p91 = por %p89, %p90
      %p92 = scmp.ne.s32.totalorder %s80, %s81
      %p93 = scmp.eq.s32.totalorder %s24, 1
      %p94 = por %p92, %p93
      %p96 = scmp.ne.s32.totalorder %s81, %s95
      %p97 = scmp.eq.s32.totalorder %s24, 0
      %p98 = por %p96, %p97
      %s99 = ssub.s32 %s18, %s25
      %p100 = scmp.eq.s32.totalorder %s99, 0
      %s102 = sadd.s32 %s101, 1
      %s103 = scalar_select %p100, %s101, %s102
      %p106 = pneg %p100
      %p107 = scmp.eq.s32.totalorder %s18, 1
      %p108 = por %p106, %p107
      %p109 = scmp.ne.s32.totalorder %s101, %s104
      %p110 = scmp.eq.s32.totalorder %s18, 0
      %p111 = por %p109, %p110
      %p112 = scmp.ne.s32.totalorder %s101, %s104
      %p113 = scmp.eq.s32.totalorder %s23, 1
      %p114 = por %p112, %p113
      %p115 = scmp.ne.s32.totalorder %s104, %s105
      %p116 = scmp.eq.s32.totalorder %s23, 0
      %p117 = por %p115, %p116
      %p118 = scmp.ne.s32.totalorder %s104, %s105
      %p119 = scmp.eq.s32.totalorder %s24, 1
      %p120 = por %p118, %p119
      %p122 = scmp.ne.s32.totalorder %s105, %s121
      %p123 = scmp.eq.s32.totalorder %s24, 0
      %p124 = por %p122, %p123
      %p125 = scmp.le.s32.totalorder 1, %s18
      %p126 = scmp.lt.s32.totalorder %s18, 3
      %p127 = pnand %p125, %p126
      %p128 = pneg %p127
      // Predicated region
      $region9: #{tpu_custom_call.1} parent=5 // pred_check
        _
      $region10: #{tpu_custom_call.1} parent=5 // pred_check_branch
        %130 = sbr.rel (%p127) target = $region12
      $region11: #{tpu_custom_call.1} parent=5 // pred_region
        %s131 = ssub.s32 %s18, 1
        // Predicated region
        $region13: #{tpu_custom_call.1} parent=11 // pred_check
          %p132 = pneg %p91
        $region14: #{tpu_custom_call.1} parent=11 // pred_check_branch
          %134 = sbr.rel (%p132) target = $region16
        $region15: #{tpu_custom_call.1} parent=11 // pred_region
          %136 = vsyncadd [#allocation6], 0
          %s138 = sshll.u32 %s2, 4
          %s139 = int_to_ptr.hbm [resolvable:$true] %s138
          %s140 = sshll.u32 [#allocation7], 4
          %s141 = int_to_ptr.vmem [resolvable:$true] %s140
          %143 = dma.hbm_to_vmem [thread:$0]  %s139, 128, %s141, [#allocation6]
        $region16: #{tpu_custom_call.1} parent=11 // pred_fallthru
          _
      $region12: #{tpu_custom_call.1} parent=5 // pred_fallthru
        _
      %p144 = scmp.lt.s32.totalorder %s18, 2
      // Predicated region
      $region17: #{tpu_custom_call.1} parent=5 // pred_check
        %p145 = pneg %p144
      $region18: #{tpu_custom_call.1} parent=5 // pred_check_branch
        %147 = sbr.rel (%p145) target = $region20
      $region19: #{tpu_custom_call.1} parent=5 // pred_region
        // Predicated region
        $region21: #{tpu_custom_call.1} parent=19 // pred_check
          %p148 = pneg %p38
        $region22: #{tpu_custom_call.1} parent=19 // pred_check_branch
          %150 = sbr.rel (%p148) target = $region24
        $region23: #{tpu_custom_call.1} parent=19 // pred_region
          %s151 = sand.u32 %s28, 1
          %s152 = scalar_lea.sflag [#allocation3], %s151
          %s153 = sand.u32 %s28, 1
          %s154 = smul.addr %s153, 80
          %s155 = scalar_lea.vmem [#allocation2], %s154
          %157 = vsyncadd %s152, 0
          %s158 = smul.addr %s18, 10
          %s159 = smul.addr %s158, 8
          %s160 = scalar_lea.hbm %s0, %s159
          %s161 = sshll.u32 %s160, 4
          %s162 = int_to_ptr.hbm [resolvable:$true] %s161
          %s163 = sshll.u32 %s155, 4
          %s164 = int_to_ptr.vmem [resolvable:$true] %s163
          %169 = dma.hbm_to_vmem [thread:$0]  %s162, 1280, %s164, %s152, 256, 256, 16
        $region24: #{tpu_custom_call.1} parent=19 // pred_fallthru
          _
        // Predicated region
        $region25: #{tpu_custom_call.1} parent=19 // pred_check
          %p170 = pneg %p64
        $region26: #{tpu_custom_call.1} parent=19 // pred_check_branch
          %172 = sbr.rel (%p170) target = $region28
        $region27: #{tpu_custom_call.1} parent=19 // pred_region
          %s173 = sand.u32 %s18, 1
          %s174 = scalar_lea.sflag [#allocation6], %s173
          %s175 = sand.u32 %s54, 1
          %s176 = scalar_lea.vmem [#allocation5], %s175
          %178 = vsyncadd %s174, 0
          %s179 = scalar_lea.hbm %s1, %s18
          %s181 = sshll.u32 %s179, 4
          %s182 = int_to_ptr.hbm [resolvable:$true] %s181
          %s183 = sshll.u32 %s176, 4
          %s184 = int_to_ptr.vmem [resolvable:$true] %s183
          %186 = dma.hbm_to_vmem [thread:$0]  %s182, 16, %s184, %s174
        $region28: #{tpu_custom_call.1} parent=19 // pred_fallthru
          _
      $region20: #{tpu_custom_call.1} parent=5 // pred_fallthru
        _
      %p187 = scmp.le.s32.totalorder 1, %s18
      %p188 = scmp.lt.s32.totalorder %s18, 3
      %p189 = pnand %p187, %p188
      %p190 = pneg %p189
      // Predicated region
      $region29: #{tpu_custom_call.1} parent=5 // pred_check
        _
      $region30: #{tpu_custom_call.1} parent=5 // pred_check_branch
        %192 = sbr.rel (%p189) target = $region32
      $region31: #{tpu_custom_call.1} parent=5 // pred_region
        %s193 = ssub.s32 %s18, 1
        %s194 = sand.u32 %s31, 1
        %s195 = scalar_lea.sflag [#allocation3], %s194
        %s196 = sand.u32 %s31, 1
        %s197 = smul.addr %s196, 80
        %s198 = scalar_lea.vmem [#allocation2], %s197
        // Predicated region
        $region33: #{tpu_custom_call.1} parent=31 // pred_check
          %p199 = pneg %p44
        $region34: #{tpu_custom_call.1} parent=31 // pred_check_branch
          %201 = sbr.rel (%p199) target = $region36
        $region35: #{tpu_custom_call.1} parent=31 // pred_region
          %203 = dma.done %s195, 1280
        $region36: #{tpu_custom_call.1} parent=31 // pred_fallthru
          _
        %s204 = sand.u32 %s23, 1
        %s205 = scalar_lea.sflag [#allocation6], %s204
        %s206 = sand.u32 %s57, 1
        %s207 = scalar_lea.vmem [#allocation5], %s206
        // Predicated region
        $region37: #{tpu_custom_call.1} parent=31 // pred_check
          %p208 = pneg %p70
        $region38: #{tpu_custom_call.1} parent=31 // pred_check_branch
          %210 = sbr.rel (%p208) target = $region40
        $region39: #{tpu_custom_call.1} parent=31 // pred_region
          %212 = dma.done %s205, 16
        $region40: #{tpu_custom_call.1} parent=31 // pred_fallthru
          _
        // Predicated region
        $region41: #{tpu_custom_call.1} parent=31 // pred_check
          %p213 = pneg %p91
        $region42: #{tpu_custom_call.1} parent=31 // pred_check_branch
          %215 = sbr.rel (%p213) target = $region44
        $region43: #{tpu_custom_call.1} parent=31 // pred_region
          %217 = dma.done [#allocation6], 128
        $region44: #{tpu_custom_call.1} parent=31 // pred_fallthru
          _
        %s218 = sand.u32 %s31, 1
        %s219 = scalar_lea.sflag [#allocation3], %s218
        %s220 = sand.u32 %s31, 1
        %s221 = smul.addr %s220, 80
        %s222 = scalar_lea.vmem [#allocation2], %s221
        %p223 = pneg %p44
        %p224 = pneg %p41
        %s225 = sand.u32 %s23, 1
        %s226 = scalar_lea.sflag [#allocation6], %s225
        %s227 = sand.u32 %s57, 1
        %s228 = scalar_lea.vmem [#allocation5], %s227
        %p229 = pneg %p70
        %p230 = pneg %p67
        %p231 = pneg %p91
        %p232 = pneg %p88
        %p233 = pneg %p117
        %p234 = pneg %p114
        %s235 = sand.u32 %s104, 1
        %s236 = scalar_lea.sflag [#allocation4], %s235
        %s237 = sand.u32 %s104, 1
        %s238 = smul.addr %s237, 16
        %s239 = scalar_lea.vmem [#allocation8], %s238
        %v240 = vld [vmem:[%s207] sm:$0x1]
        %v241 = vxor.u32 %v240, 2147483648
        %v242 = vmul.f32 %v241, 1.442695
        %v243 = vpow.pop %v242
        %v244 = vadd.f32 %v243, 1.0
        %v245 = vrcp.pop %v244
        %v246 = vmul.f32 %v244, %v245
        %v247 = vsub.f32 1.0, %v246
        %v248 = vmul.f32 %v245, %v247
        %v249 = vadd.f32 %v245, %v248
        %vm250 = vweird.f32 %v244
        %vm251 = vweird.f32 %v245
        %vm252 = vmor %vm250, %vm251
        %v253 = vsel %vm252, %v245, %v249
        %v254 = vand.u32 2147483647, %v244
        %vm255 = vcmp.eq.f32.partialorder %v254, 8.507059e+37
        %v256 = vand.u32 %v244, 2147483648
        %v257 = vor.u32 1.1754944e-38, %v256
        %v258 = vsel %vm255, %v257, %v253
        %v259 = vmul.f32 1.0, %v258
        %v260 = vld [vmem:[#allocation7] sm:$0xff]
        %v262 = vperm.slane %v259, 0
        %v264 = vmul.f32 %v260, %v262
        %v265 = vld [vmem:[%s198] sm:$0xff]
        %v266 = vld [vmem:[%s198 + $0x8] sm:$0xff]
        %v267 = vld [vmem:[%s198 + $0x10] sm:$0xff]
        %v268 = vld [vmem:[%s198 + $0x18] sm:$0xff]
        %v269 = vld [vmem:[%s198 + $0x20] sm:$0xff]
        %v270 = vld [vmem:[%s198 + $0x28] sm:$0xff]
        %v271 = vld [vmem:[%s198 + $0x30] sm:$0xff]
        %v272 = vld [vmem:[%s198 + $0x38] sm:$0xff]
        %v273 = vld [vmem:[%s198 + $0x40] sm:$0xff]
        %v274 = vld [vmem:[%s198 + $0x48] sm:$0xff]
        %vm275 = vcmask 326656
        %v277 = vsel %vm275, %v264, 0
        %279 = vmatpush.msra.mxu0 0.0
        %280 = vmatpush.msra.mxu0 0.0
        %281 = vmatpush.msra.mxu0 0.0
        %282 = vmatpush.msra.mxu0 0.0
        %283 = vmatpush.msra.mxu0 0.0
        %284 = vmatpush.msra.mxu0 0.0
        %285 = vmatpush.msra.mxu0 0.0
        %286 = vmatpush.msra.mxu0 0.0
        %287 = vmatpush.msra.mxu0 0.0
        %288 = vmatpush.msra.mxu0 0.0
        %289 = vmatpush.msra.mxu0 0.0
        %290 = vmatpush.msra.mxu0 %v273
        %291 = vmatpush.msra.mxu0 %v271
        %292 = vmatpush.msra.mxu0 %v269
        %293 = vmatpush.msra.mxu0 %v267
        %294 = vmatpush.msra.mxu0 %v265
        %295 = vmatmul.f32.gmra.mxu0 %v277
        %v296 = vpop.f32.mrf.mxu0
        %v297 = vadd.f32 0.0, %v296
        %298 = vdwg.mxu0
        %299 = vmatpush.msra.mxu0 0.0
        %300 = vmatpush.msra.mxu0 0.0
        %301 = vmatpush.msra.mxu0 0.0
        %302 = vmatpush.msra.mxu0 0.0
        %303 = vmatpush.msra.mxu0 0.0
        %304 = vmatpush.msra.mxu0 0.0
        %305 = vmatpush.msra.mxu0 0.0
        %306 = vmatpush.msra.mxu0 0.0
        %307 = vmatpush.msra.mxu0 0.0
        %308 = vmatpush.msra.mxu0 0.0
        %309 = vmatpush.msra.mxu0 0.0
        %310 = vmatpush.msra.mxu0 %v274
        %311 = vmatpush.msra.mxu0 %v272
        %312 = vmatpush.msra.mxu0 %v270
        %313 = vmatpush.msra.mxu0 %v268
        %314 = vmatpush.msra.mxu0 %v266
        %315 = vmatmul.f32.gmra.mxu0 %v277
        %v316 = vpop.f32.mrf.mxu0
        %v317 = vadd.f32 0.0, %v316
        %318 = vdwg.mxu0
        %319 = vst [vmem:[%s239] sm:$0xff] %v297
        %320 = vst [vmem:[%s239 + $0x8] sm:$0xff] %v317
        %s321 = sand.u32 %s104, 1
        %s322 = scalar_lea.sflag [#allocation4], %s321
        %s323 = sand.u32 %s104, 1
        %s324 = smul.addr %s323, 16
        %s325 = scalar_lea.vmem [#allocation8], %s324
        // Predicated region
        $region45: #{tpu_custom_call.1} parent=31 // pred_check
          %p326 = pneg %p114
        $region46: #{tpu_custom_call.1} parent=31 // pred_check_branch
          %328 = sbr.rel (%p326) target = $region48
        $region47: #{tpu_custom_call.1} parent=31 // pred_region
          %330 = vsyncadd %s322, 0
          %s331 = smul.addr %s23, 2
          %s332 = smul.addr %s331, 8
          %s333 = scalar_lea.hbm %s3, %s332
          %s335 = sshll.u32 %s325, 4
          %s336 = int_to_ptr.vmem [resolvable:$true] %s335
          %s337 = sshll.u32 %s333, 4
          %s338 = int_to_ptr.hbm [resolvable:$true] %s337
          %340 = dma.vmem_to_hbm [thread:$0]  %s336, 256, %s338, %s322
        $region48: #{tpu_custom_call.1} parent=31 // pred_fallthru
          _
      $region32: #{tpu_custom_call.1} parent=5 // pred_fallthru
        _
      %p341 = scmp.le.s32.totalorder 2, %s18
      // Predicated region
      $region49: #{tpu_custom_call.1} parent=5 // pred_check
        %p342 = pneg %p341
      $region50: #{tpu_custom_call.1} parent=5 // pred_check_branch
        %344 = sbr.rel (%p342) target = $region52
      $region51: #{tpu_custom_call.1} parent=5 // pred_region
        %s345 = ssub.s32 %s18, 2
        // Predicated region
        $region53: #{tpu_custom_call.1} parent=51 // pred_check
          %p346 = pneg %p120
        $region54: #{tpu_custom_call.1} parent=51 // pred_check_branch
          %348 = sbr.rel (%p346) target = $region56
        $region55: #{tpu_custom_call.1} parent=51 // pred_region
          %s349 = sand.u32 %s105, 1
          %s350 = scalar_lea.sflag [#allocation4], %s349
          %s351 = sand.u32 %s105, 1
          %s352 = smul.addr %s351, 16
          %s353 = scalar_lea.vmem [#allocation8], %s352
          %355 = dma.done %s350, 256
        $region56: #{tpu_custom_call.1} parent=51 // pred_fallthru
          _
      $region52: #{tpu_custom_call.1} parent=5 // pred_fallthru
        _
    $region6: #{tpu_custom_call.1} parent=1 // loop_footer
      %s22 = sadd.s32 1, %s18
    $region7: #{tpu_custom_call.1} parent=1 // loop_footer_branch
      %17 = sbr.rel target = $region3
    $region8: #{tpu_custom_call.1} parent=1 // loop_exit
      _
    %356 = vsyncpa [#allocation3], 1
    %s357 = scalar_lea.sflag [#allocation3], 1
    %358 = vsyncpa %s357, 1
    %359 = vsyncpa [#allocation6], 1
    %s360 = scalar_lea.sflag [#allocation6], 1
    %361 = vsyncpa %s360, 1
    %362 = vsyncpa [#allocation4], 1
    %s363 = scalar_lea.sflag [#allocation4], 1
    %364 = vsyncpa %s363, 1

</llo_original>
